<compile_context>
chip_gen: v7x
topology: tpu7x:2x2x1
jax: 0.10.0
libtpu: 0.0.40
codegen_flags: <defaults>
</compile_context>

<pallas_src>
import functools

import jax
import jax.numpy as jnp
from jax.experimental import pallas as pl
from jax.experimental.pallas import tpu as pltpu


def _round_up(x, m):
    return ((x + m - 1) // m) * m


def _tpu_vmem_capacity_bytes(default=64 * 1024 * 1024):
    """Physical VMEM per TensorCore (128 MiB v5e/v6e, 64 MiB v7x); safe fallback."""
    try:
        info = pltpu.get_tpu_info()
        return int(getattr(info, "vmem_capacity_bytes", default))
    except Exception:
        return default


def attention_kernel(x_ref, wq_ref, wkv_ref, wout_ref, bout_ref, o_ref,
                     k_scr, v_scr, stage_scr, *, heads, dim_head, n_real):
    """One grid step == (one batch element, one query tile).

    x_ref    : (1, N_pad, D)   bf16 full (padded) sequence of this batch element
    wq_ref   : (D, inner)      bf16 Q projection weight; softmax scale pre-folded
    wkv_ref  : (D, 2*inner)    bf16 fused K/V projection weight
    wout_ref : (inner, D)      bf16 output projection weight
    bout_ref : (1, D)          f32 output projection bias
    o_ref    : (1, TQ, D)      output tokens of this query tile
    k_scr    : (N_pad, inner)  bf16 VMEM cache of K (persists across query tiles)
    v_scr    : (N_pad, inner)  bf16 VMEM cache of V
    stage_scr: (TQ, inner)     f32 staging buffer for per-head attention outputs
    """
    inner = heads * dim_head
    n_pad = k_scr.shape[0]
    tq = o_ref.shape[1]
    qi = pl.program_id(1)

    # ---- K/V projection: computed ONCE per batch element, cached in VMEM. ----
    @pl.when(qi == 0)
    def _():
        x_all = x_ref[0]                                                # (N_pad, D)
        kv = jnp.dot(x_all, wkv_ref[...], preferred_element_type=jnp.float32)
        k_scr[...] = kv[:, :inner].astype(jnp.bfloat16)
        v_scr[...] = kv[:, inner:].astype(jnp.bfloat16)

    # ---- Q projection for this tile; query rows sliced from the resident block.
    q_start = pl.multiple_of(qi * tq, tq)
    xq = x_ref[0, pl.ds(q_start, tq), :]                                # (TQ, D)
    q_all = jnp.dot(xq, wq_ref[...],
                    preferred_element_type=jnp.float32).astype(jnp.bfloat16)

    k_all = k_scr[...]                                                  # (N_pad, inner)
    v_all = v_scr[...]

    # Additive mask for key padding (only traced when the sequence was padded).
    key_mask = None
    if n_pad != n_real:
        col = jax.lax.broadcasted_iota(jnp.int32, (tq, n_pad), 1)
        key_mask = jnp.where(col < n_real, 0.0, -1e30).astype(jnp.float32)

    for h in range(heads):                                              # static unroll
        lo, hi = h * dim_head, (h + 1) * dim_head
        q = q_all[:, lo:hi]                                             # (TQ, dh)
        k = k_all[:, lo:hi]                                             # (N_pad, dh)
        v = v_all[:, lo:hi]                                             # (N_pad, dh)

        dots = jnp.dot(q, k.T, preferred_element_type=jnp.float32)      # (TQ, N_pad)
        if key_mask is not None:
            dots = dots + key_mask

        # Numerically stable softmax; reciprocal-multiply (EUP) instead of divide.
        dots = dots - jnp.max(dots, axis=-1, keepdims=True)
        e = jnp.exp(dots)
        inv = pl.reciprocal(jnp.sum(e, axis=-1, keepdims=True), approx=True)
        attn = (e * inv).astype(jnp.bfloat16)

        # Stage this head's output; output projection happens once, after the loop.
        stage_scr[:, lo:hi] = jnp.dot(attn, v, preferred_element_type=jnp.float32)

    # Single full-width (TQ, inner) @ (inner, D) output projection + bias.
    y = jnp.dot(stage_scr[...].astype(jnp.bfloat16), wout_ref[...],
                preferred_element_type=jnp.float32) + bout_ref[...]
    o_ref[0] = y.astype(o_ref.dtype)


def attention_forward(x, w_qkv, w_out, b_out, *, heads, dim_head):
    B, N, D = x.shape
    inner = heads * dim_head
    scale = dim_head ** (-0.5)

    vmem_cap = _tpu_vmem_capacity_bytes()

    # Query-tile size / sequence padding:
    #  * large N: pad to a tile multiple so every tile is full (caps the live
    #    score matrix at (TQ, N_pad), keeps q-tile structure when N % 128 != 0);
    #    bigger tiles when VMEM allows (v5e / v6e).
    #  * small N: a single query tile, padded only to the sublane multiple (8).
    if N > 128:
        tq = 256 if (vmem_cap >= 96 * 1024 * 1024 and N >= 512) else 128
        n_pad = _round_up(N, tq)
    else:
        n_pad = _round_up(N, 8)
        tq = n_pad
    n_qt = n_pad // tq

    # bf16 activations & weights in HBM (half the DMA bytes / VMEM footprint);
    # all MXU accumulation inside the kernel is f32.  Softmax scale folded into W_q.
    x_in = x
    if n_pad != N:
        x_in = jnp.pad(x_in, ((0, 0), (0, n_pad - N), (0, 0)))
    x_in = x_in.astype(jnp.bfloat16)
    wq = (w_qkv[:, :inner] * scale).astype(jnp.bfloat16)
    wkv = w_qkv[:, inner:].astype(jnp.bfloat16)
    wout = w_out.astype(jnp.bfloat16)
    bout = b_out.reshape(1, -1).astype(jnp.float32)

    kernel = functools.partial(attention_kernel, heads=heads, dim_head=dim_head,
                               n_real=N)

    # Cost estimate (KV projection counted once per batch element now).
    flops = 2 * B * (n_pad * D * 3 * inner                    # QKV projections
                     + heads * 2 * n_pad * n_pad * dim_head   # QK^T and attn @ V
                     + n_pad * inner * D)                     # output projection
    transcendentals = B * heads * n_pad * n_pad
    bytes_accessed = (B * n_pad * D * 2                       # x (bf16, streamed once)
                      + 2 * (wq.size + wkv.size + wout.size)  # bf16 weights
                      + 4 * bout.size
                      + B * n_pad * D * x.dtype.itemsize)     # output

    # ~75% of physical VMEM (128 MiB on v5e/v6e, 64 MiB on v7x), capped at 96 MiB.
    vmem_limit = max(32 * 1024 * 1024, min((vmem_cap * 3) // 4, 96 * 1024 * 1024))

    out = pl.pallas_call(
        kernel,
        out_shape=jax.ShapeDtypeStruct((B, n_pad, D), x.dtype),
        grid=(B, n_qt),
        in_specs=[
            pl.BlockSpec((1, n_pad, D), lambda b, q: (b, 0, 0)),   # x (q-invariant)
            pl.BlockSpec((D, inner), lambda b, q: (0, 0)),         # W_q (scale folded)
            pl.BlockSpec((D, 2 * inner), lambda b, q: (0, 0)),     # W_kv
            pl.BlockSpec((inner, D), lambda b, q: (0, 0)),         # W_out
            pl.BlockSpec((1, D), lambda b, q: (0, 0)),             # b_out
        ],
        out_specs=pl.BlockSpec((1, tq, D), lambda b, q: (b, q, 0)),
        scratch_shapes=[
            pltpu.VMEM((n_pad, inner), jnp.bfloat16),              # cached K
            pltpu.VMEM((n_pad, inner), jnp.bfloat16),              # cached V
            pltpu.VMEM((tq, inner), jnp.float32),                  # staged head outputs
        ],
        compiler_params=pltpu.CompilerParams(
            # q axis must be "arbitrary": the K/V scratch carries state across it.
            dimension_semantics=("parallel", "arbitrary"),
            vmem_limit_bytes=int(vmem_limit)),
        cost_estimate=pl.CostEstimate(flops=int(flops),
                                      transcendentals=int(transcendentals),
                                      bytes_accessed=int(bytes_accessed)),
    )(x_in, wq, wkv, wout, bout)

    if n_pad != N:
        out = out[:, :N, :]
    return out


def attention_reference(x, w_qkv, w_out, b_out, *, heads, dim_head):
    """Pure-JAX f32 reference mirroring the PyTorch forward, for verification."""
    B, N, D = x.shape
    inner = heads * dim_head
    scale = dim_head ** (-0.5)
    qkv = x @ w_qkv                                                # (B, N, 3*inner)
    q, k, v = jnp.split(qkv, 3, axis=-1)

    def to_heads(t):                                               # 'b n (h d) -> b h n d'
        return t.reshape(B, N, heads, dim_head).transpose(0, 2, 1, 3)

    q, k, v = map(to_heads, (q, k, v))
    dots = jnp.einsum('bhnd,bhmd->bhnm', q, k) * scale
    attn = jax.nn.softmax(dots, axis=-1)
    out = jnp.einsum('bhnm,bhmd->bhnd', attn, v)
    out = out.transpose(0, 2, 1, 3).reshape(B, N, inner)           # 'b h n d -> b n (h d)'
    return out @ w_out + b_out


if __name__ == "__main__":
    # Small shapes consistent with the module's forward: x is (batch, seq, dim).
    B, N, D = 2, 8, 32
    heads, dim_head = 4, 16
    inner = heads * dim_head

    key = jax.random.PRNGKey(0)
    k_x, k_qkv, k_out, k_b = jax.random.split(key, 4)

    x = jax.random.normal(k_x, (B, N, D), dtype=jnp.float32)
    # nn.Linear(dim, inner*3, bias=False): stored here as (in, out).
    w_qkv = jax.random.normal(k_qkv, (D, 3 * inner), dtype=jnp.float32) * 0.05
    # nn.Linear(inner, dim) with bias (project_out=True since heads != 1).
    w_out = jax.random.normal(k_out, (inner, D), dtype=jnp.float32) * 0.05
    b_out = jax.random.normal(k_b, (1, D), dtype=jnp.float32) * 0.05

    y = attention_forward(x, w_qkv, w_out, b_out, heads=heads, dim_head=dim_head)
    y = jax.block_until_ready(y)

    y_ref = attention_reference(x, w_qkv, w_out, b_out, heads=heads, dim_head=dim_head)
    assert y.shape == (B, N, D)
    # bf16 MXU operands + approximate reciprocal -> loosened tolerance vs f32 reference.
    assert jnp.allclose(y, y_ref, rtol=2e-2, atol=2e-2), "Pallas output mismatch vs reference"

    print("KERNEL_OK")
</pallas_src>

<mosaic_0001>
module attributes {stable_mosaic.version = 11 : i64} {
  func.func @attention_kernel(%arg0: i32, %arg1: i32, %arg2: memref<1x8x32xbf16, #tpu.memory_space<vmem>>, %arg3: memref<32x64xbf16, #tpu.memory_space<vmem>>, %arg4: memref<32x128xbf16, #tpu.memory_space<vmem>>, %arg5: memref<64x32xbf16, #tpu.memory_space<vmem>>, %arg6: memref<1x32xf32, #tpu.memory_space<vmem>>, %arg7: memref<1x8x32xf32, #tpu.memory_space<vmem>>, %arg8: memref<8x64xbf16, #tpu.memory_space<vmem>>, %arg9: memref<8x64xbf16, #tpu.memory_space<vmem>>, %arg10: memref<8x64xf32, #tpu.memory_space<vmem>>) attributes {dimension_semantics = [#tpu.dimension_semantics<parallel>, #tpu.dimension_semantics<arbitrary>], iteration_bounds = array<i64: 2, 1>, scalar_prefetch = 0 : i64, scratch_operands = 3 : i64, tpu.core_type = #tpu.core_type<tc>, window_params = [{transform_indices = @transform_0, window_bounds = array<i64: 1, 8, 32>}, {pipeline_mode = #tpu.pipeline_mode<synchronous>, transform_indices = @transform_1, window_bounds = array<i64: 32, 64>}, {pipeline_mode = #tpu.pipeline_mode<synchronous>, transform_indices = @transform_2, window_bounds = array<i64: 32, 128>}, {pipeline_mode = #tpu.pipeline_mode<synchronous>, transform_indices = @transform_3, window_bounds = array<i64: 64, 32>}, {pipeline_mode = #tpu.pipeline_mode<synchronous>, transform_indices = @transform_4, window_bounds = array<i64: 1, 32>}, {transform_indices = @transform_5, window_bounds = array<i64: 1, 8, 32>}]} {
    %c0_i32 = arith.constant 0 : i32
    %0 = arith.cmpi eq, %arg1, %c0_i32 : i32
    %1 = arith.extui %0 : i1 to i32
    %c0_i32_0 = arith.constant 0 : i32
    %2 = arith.cmpi ne, %1, %c0_i32_0 : i32
    scf.if %2 {
      %c0_39 = arith.constant 0 : index
      %c0_40 = arith.constant 0 : index
      %c0_41 = arith.constant 0 : index
      %95 = vector.load %arg2[%c0_39, %c0_40, %c0_41] : memref<1x8x32xbf16, #tpu.memory_space<vmem>>, vector<1x8x32xbf16>
      %96 = vector.shape_cast %95 : vector<1x8x32xbf16> to vector<8x32xbf16>
      %c0_42 = arith.constant 0 : index
      %c0_43 = arith.constant 0 : index
      %97 = vector.load %arg4[%c0_42, %c0_43] : memref<32x128xbf16, #tpu.memory_space<vmem>>, vector<32x128xbf16>
      %cst_44 = arith.constant dense<0.000000e+00> : vector<8x128xf32>
      %98 = tpu.matmul %96, %97, %cst_44 {dimension_numbers = #tpu.dot_dimension_numbers<[1], [0], [0], [1], [0, 0, 1, 1], [], []>} : vector<8x32xbf16>, vector<32x128xbf16>, vector<8x128xf32> -> vector<8x128xf32>
      %99 = vector.extract_strided_slice %98 {offsets = [0, 0], sizes = [8, 64], strides = [1, 1]} : vector<8x128xf32> to vector<8x64xf32>
      %100 = arith.truncf %99 : vector<8x64xf32> to vector<8x64xbf16>
      %c0_45 = arith.constant 0 : index
      %c0_46 = arith.constant 0 : index
      %101 = vector.load %arg8[%c0_45, %c0_46] : memref<8x64xbf16, #tpu.memory_space<vmem>>, vector<8x64xbf16>
      tpu.vector_store %arg8[%c0_45, %c0_46], %100 {strides = array<i32>} : memref<8x64xbf16, #tpu.memory_space<vmem>>, vector<8x64xbf16>,
      %102 = vector.extract_strided_slice %98 {offsets = [0, 64], sizes = [8, 64], strides = [1, 1]} : vector<8x128xf32> to vector<8x64xf32>
      %103 = arith.truncf %102 : vector<8x64xf32> to vector<8x64xbf16>
      %c0_47 = arith.constant 0 : index
      %c0_48 = arith.constant 0 : index
      %104 = vector.load %arg9[%c0_47, %c0_48] : memref<8x64xbf16, #tpu.memory_space<vmem>>, vector<8x64xbf16>
      tpu.vector_store %arg9[%c0_47, %c0_48], %103 {strides = array<i32>} : memref<8x64xbf16, #tpu.memory_space<vmem>>, vector<8x64xbf16>,
    } else {
    }
    %c8_i32 = arith.constant 8 : i32
    %3 = arith.muli %arg1, %c8_i32 : i32
    %4 = tpu.assume_multiple %3, 8 : i32
    %c0 = arith.constant 0 : index
    %5 = arith.index_cast %4 : i32 to index
    %c0_1 = arith.constant 0 : index
    %6 = vector.load %arg2[%c0, %5, %c0_1] : memref<1x8x32xbf16, #tpu.memory_space<vmem>>, vector<1x8x32xbf16>
    %7 = vector.shape_cast %6 : vector<1x8x32xbf16> to vector<8x32xbf16>
    %c0_2 = arith.constant 0 : index
    %c0_3 = arith.constant 0 : index
    %8 = vector.load %arg3[%c0_2, %c0_3] : memref<32x64xbf16, #tpu.memory_space<vmem>>, vector<32x64xbf16>
    %cst = arith.constant dense<0.000000e+00> : vector<8x64xf32>
    %9 = tpu.matmul %7, %8, %cst {dimension_numbers = #tpu.dot_dimension_numbers<[1], [0], [0], [1], [0, 0, 1, 1], [], []>} : vector<8x32xbf16>, vector<32x64xbf16>, vector<8x64xf32> -> vector<8x64xf32>
    %10 = arith.truncf %9 : vector<8x64xf32> to vector<8x64xbf16>
    %c0_4 = arith.constant 0 : index
    %c0_5 = arith.constant 0 : index
    %11 = vector.load %arg8[%c0_4, %c0_5] : memref<8x64xbf16, #tpu.memory_space<vmem>>, vector<8x64xbf16>
    %c0_6 = arith.constant 0 : index
    %c0_7 = arith.constant 0 : index
    %12 = vector.load %arg9[%c0_6, %c0_7] : memref<8x64xbf16, #tpu.memory_space<vmem>>, vector<8x64xbf16>
    %13 = vector.extract_strided_slice %10 {offsets = [0, 0], sizes = [8, 16], strides = [1, 1]} : vector<8x64xbf16> to vector<8x16xbf16>
    %14 = vector.extract_strided_slice %11 {offsets = [0, 0], sizes = [8, 16], strides = [1, 1]} : vector<8x64xbf16> to vector<8x16xbf16>
    %15 = vector.extract_strided_slice %12 {offsets = [0, 0], sizes = [8, 16], strides = [1, 1]} : vector<8x64xbf16> to vector<8x16xbf16>
    %16 = tpu.transpose %14, [1, 0] : vector<8x16xbf16> -> vector<16x8xbf16>
    %cst_8 = arith.constant dense<0.000000e+00> : vector<8x8xf32>
    %17 = tpu.matmul %13, %16, %cst_8 {dimension_numbers = #tpu.dot_dimension_numbers<[1], [0], [0], [1], [0, 0, 1, 1], [], []>} : vector<8x16xbf16>, vector<16x8xbf16>, vector<8x8xf32> -> vector<8x8xf32>
    %cst_9 = arith.constant dense<0xFF800000> : vector<8xf32>
    %18 = vector.multi_reduction <maximumf>, %17, %cst_9 [1] : vector<8x8xf32> to vector<8xf32>
    %19 = vector.shape_cast %18 : vector<8xf32> to vector<8x1xf32>
    %20 = vector.broadcast %19 : vector<8x1xf32> to vector<8x8xf32>
    %21 = arith.subf %17, %20 : vector<8x8xf32>
    %22 = math.exp %21 : vector<8x8xf32>
    %cst_10 = arith.constant dense<0.000000e+00> : vector<8xf32>
    %23 = vector.multi_reduction <add>, %22, %cst_10 [1] : vector<8x8xf32> to vector<8xf32>
    %24 = vector.shape_cast %23 : vector<8xf32> to vector<8x1xf32>
    %25 = tpu.reciprocal %24 {approx = true} : vector<8x1xf32> -> vector<8x1xf32>
    %26 = vector.broadcast %25 : vector<8x1xf32> to vector<8x8xf32>
    %27 = arith.mulf %22, %26 : vector<8x8xf32>
    %28 = arith.truncf %27 : vector<8x8xf32> to vector<8x8xbf16>
    %cst_11 = arith.constant dense<0.000000e+00> : vector<8x16xf32>
    %29 = tpu.matmul %28, %15, %cst_11 {dimension_numbers = #tpu.dot_dimension_numbers<[1], [0], [0], [1], [0, 0, 1, 1], [], []>} : vector<8x8xbf16>, vector<8x16xbf16>, vector<8x16xf32> -> vector<8x16xf32>
    %c0_12 = arith.constant 0 : index
    %c0_13 = arith.constant 0 : index
    %30 = vector.load %arg10[%c0_12, %c0_13] : memref<8x64xf32, #tpu.memory_space<vmem>>, vector<8x16xf32>
    tpu.vector_store %arg10[%c0_12, %c0_13], %29 {strides = array<i32>} : memref<8x64xf32, #tpu.memory_space<vmem>>, vector<8x16xf32>,
    %31 = vector.extract_strided_slice %10 {offsets = [0, 16], sizes = [8, 16], strides = [1, 1]} : vector<8x64xbf16> to vector<8x16xbf16>
    %32 = vector.extract_strided_slice %11 {offsets = [0, 16], sizes = [8, 16], strides = [1, 1]} : vector<8x64xbf16> to vector<8x16xbf16>
    %33 = vector.extract_strided_slice %12 {offsets = [0, 16], sizes = [8, 16], strides = [1, 1]} : vector<8x64xbf16> to vector<8x16xbf16>
    %34 = tpu.transpose %32, [1, 0] : vector<8x16xbf16> -> vector<16x8xbf16>
    %cst_14 = arith.constant dense<0.000000e+00> : vector<8x8xf32>
    %35 = tpu.matmul %31, %34, %cst_14 {dimension_numbers = #tpu.dot_dimension_numbers<[1], [0], [0], [1], [0, 0, 1, 1], [], []>} : vector<8x16xbf16>, vector<16x8xbf16>, vector<8x8xf32> -> vector<8x8xf32>
    %cst_15 = arith.constant dense<0xFF800000> : vector<8xf32>
    %36 = vector.multi_reduction <maximumf>, %35, %cst_15 [1] : vector<8x8xf32> to vector<8xf32>
    %37 = vector.shape_cast %36 : vector<8xf32> to vector<8x1xf32>
    %38 = vector.broadcast %37 : vector<8x1xf32> to vector<8x8xf32>
    %39 = arith.subf %35, %38 : vector<8x8xf32>
    %40 = math.exp %39 : vector<8x8xf32>
    %cst_16 = arith.constant dense<0.000000e+00> : vector<8xf32>
    %41 = vector.multi_reduction <add>, %40, %cst_16 [1] : vector<8x8xf32> to vector<8xf32>
    %42 = vector.shape_cast %41 : vector<8xf32> to vector<8x1xf32>
    %43 = tpu.reciprocal %42 {approx = true} : vector<8x1xf32> -> vector<8x1xf32>
    %44 = vector.broadcast %43 : vector<8x1xf32> to vector<8x8xf32>
    %45 = arith.mulf %40, %44 : vector<8x8xf32>
    %46 = arith.truncf %45 : vector<8x8xf32> to vector<8x8xbf16>
    %cst_17 = arith.constant dense<0.000000e+00> : vector<8x16xf32>
    %47 = tpu.matmul %46, %33, %cst_17 {dimension_numbers = #tpu.dot_dimension_numbers<[1], [0], [0], [1], [0, 0, 1, 1], [], []>} : vector<8x8xbf16>, vector<8x16xbf16>, vector<8x16xf32> -> vector<8x16xf32>
    %c0_18 = arith.constant 0 : index
    %c16 = arith.constant 16 : index
    %48 = vector.load %arg10[%c0_18, %c16] : memref<8x64xf32, #tpu.memory_space<vmem>>, vector<8x16xf32>
    tpu.vector_store %arg10[%c0_18, %c16], %47 {strides = array<i32>} : memref<8x64xf32, #tpu.memory_space<vmem>>, vector<8x16xf32>,
    %49 = vector.extract_strided_slice %10 {offsets = [0, 32], sizes = [8, 16], strides = [1, 1]} : vector<8x64xbf16> to vector<8x16xbf16>
    %50 = vector.extract_strided_slice %11 {offsets = [0, 32], sizes = [8, 16], strides = [1, 1]} : vector<8x64xbf16> to vector<8x16xbf16>
    %51 = vector.extract_strided_slice %12 {offsets = [0, 32], sizes = [8, 16], strides = [1, 1]} : vector<8x64xbf16> to vector<8x16xbf16>
    %52 = tpu.transpose %50, [1, 0] : vector<8x16xbf16> -> vector<16x8xbf16>
    %cst_19 = arith.constant dense<0.000000e+00> : vector<8x8xf32>
    %53 = tpu.matmul %49, %52, %cst_19 {dimension_numbers = #tpu.dot_dimension_numbers<[1], [0], [0], [1], [0, 0, 1, 1], [], []>} : vector<8x16xbf16>, vector<16x8xbf16>, vector<8x8xf32> -> vector<8x8xf32>
    %cst_20 = arith.constant dense<0xFF800000> : vector<8xf32>
    %54 = vector.multi_reduction <maximumf>, %53, %cst_20 [1] : vector<8x8xf32> to vector<8xf32>
    %55 = vector.shape_cast %54 : vector<8xf32> to vector<8x1xf32>
    %56 = vector.broadcast %55 : vector<8x1xf32> to vector<8x8xf32>
    %57 = arith.subf %53, %56 : vector<8x8xf32>
    %58 = math.exp %57 : vector<8x8xf32>
    %cst_21 = arith.constant dense<0.000000e+00> : vector<8xf32>
    %59 = vector.multi_reduction <add>, %58, %cst_21 [1] : vector<8x8xf32> to vector<8xf32>
    %60 = vector.shape_cast %59 : vector<8xf32> to vector<8x1xf32>
    %61 = tpu.reciprocal %60 {approx = true} : vector<8x1xf32> -> vector<8x1xf32>
    %62 = vector.broadcast %61 : vector<8x1xf32> to vector<8x8xf32>
    %63 = arith.mulf %58, %62 : vector<8x8xf32>
    %64 = arith.truncf %63 : vector<8x8xf32> to vector<8x8xbf16>
    %cst_22 = arith.constant dense<0.000000e+00> : vector<8x16xf32>
    %65 = tpu.matmul %64, %51, %cst_22 {dimension_numbers = #tpu.dot_dimension_numbers<[1], [0], [0], [1], [0, 0, 1, 1], [], []>} : vector<8x8xbf16>, vector<8x16xbf16>, vector<8x16xf32> -> vector<8x16xf32>
    %c0_23 = arith.constant 0 : index
    %c32 = arith.constant 32 : index
    %66 = vector.load %arg10[%c0_23, %c32] : memref<8x64xf32, #tpu.memory_space<vmem>>, vector<8x16xf32>
    tpu.vector_store %arg10[%c0_23, %c32], %65 {strides = array<i32>} : memref<8x64xf32, #tpu.memory_space<vmem>>, vector<8x16xf32>,
    %67 = vector.extract_strided_slice %10 {offsets = [0, 48], sizes = [8, 16], strides = [1, 1]} : vector<8x64xbf16> to vector<8x16xbf16>
    %68 = vector.extract_strided_slice %11 {offsets = [0, 48], sizes = [8, 16], strides = [1, 1]} : vector<8x64xbf16> to vector<8x16xbf16>
    %69 = vector.extract_strided_slice %12 {offsets = [0, 48], sizes = [8, 16], strides = [1, 1]} : vector<8x64xbf16> to vector<8x16xbf16>
    %70 = tpu.transpose %68, [1, 0] : vector<8x16xbf16> -> vector<16x8xbf16>
    %cst_24 = arith.constant dense<0.000000e+00> : vector<8x8xf32>
    %71 = tpu.matmul %67, %70, %cst_24 {dimension_numbers = #tpu.dot_dimension_numbers<[1], [0], [0], [1], [0, 0, 1, 1], [], []>} : vector<8x16xbf16>, vector<16x8xbf16>, vector<8x8xf32> -> vector<8x8xf32>
    %cst_25 = arith.constant dense<0xFF800000> : vector<8xf32>
    %72 = vector.multi_reduction <maximumf>, %71, %cst_25 [1] : vector<8x8xf32> to vector<8xf32>
    %73 = vector.shape_cast %72 : vector<8xf32> to vector<8x1xf32>
    %74 = vector.broadcast %73 : vector<8x1xf32> to vector<8x8xf32>
    %75 = arith.subf %71, %74 : vector<8x8xf32>
    %76 = math.exp %75 : vector<8x8xf32>
    %cst_26 = arith.constant dense<0.000000e+00> : vector<8xf32>
    %77 = vector.multi_reduction <add>, %76, %cst_26 [1] : vector<8x8xf32> to vector<8xf32>
    %78 = vector.shape_cast %77 : vector<8xf32> to vector<8x1xf32>
    %79 = tpu.reciprocal %78 {approx = true} : vector<8x1xf32> -> vector<8x1xf32>
    %80 = vector.broadcast %79 : vector<8x1xf32> to vector<8x8xf32>
    %81 = arith.mulf %76, %80 : vector<8x8xf32>
    %82 = arith.truncf %81 : vector<8x8xf32> to vector<8x8xbf16>
    %cst_27 = arith.constant dense<0.000000e+00> : vector<8x16xf32>
    %83 = tpu.matmul %82, %69, %cst_27 {dimension_numbers = #tpu.dot_dimension_numbers<[1], [0], [0], [1], [0, 0, 1, 1], [], []>} : vector<8x8xbf16>, vector<8x16xbf16>, vector<8x16xf32> -> vector<8x16xf32>
    %c0_28 = arith.constant 0 : index
    %c48 = arith.constant 48 : index
    %84 = vector.load %arg10[%c0_28, %c48] : memref<8x64xf32, #tpu.memory_space<vmem>>, vector<8x16xf32>
    tpu.vector_store %arg10[%c0_28, %c48], %83 {strides = array<i32>} : memref<8x64xf32, #tpu.memory_space<vmem>>, vector<8x16xf32>,
    %c0_29 = arith.constant 0 : index
    %c0_30 = arith.constant 0 : index
    %85 = vector.load %arg10[%c0_29, %c0_30] : memref<8x64xf32, #tpu.memory_space<vmem>>, vector<8x64xf32>
    %86 = arith.truncf %85 : vector<8x64xf32> to vector<8x64xbf16>
    %c0_31 = arith.constant 0 : index
    %c0_32 = arith.constant 0 : index
    %87 = vector.load %arg5[%c0_31, %c0_32] : memref<64x32xbf16, #tpu.memory_space<vmem>>, vector<64x32xbf16>
    %cst_33 = arith.constant dense<0.000000e+00> : vector<8x32xf32>
    %88 = tpu.matmul %86, %87, %cst_33 {dimension_numbers = #tpu.dot_dimension_numbers<[1], [0], [0], [1], [0, 0, 1, 1], [], []>} : vector<8x64xbf16>, vector<64x32xbf16>, vector<8x32xf32> -> vector<8x32xf32>
    %c0_34 = arith.constant 0 : index
    %c0_35 = arith.constant 0 : index
    %89 = vector.load %arg6[%c0_34, %c0_35] : memref<1x32xf32, #tpu.memory_space<vmem>>, vector<1x32xf32>
    %90 = vector.broadcast %89 : vector<1x32xf32> to vector<8x32xf32>
    %91 = arith.addf %88, %90 : vector<8x32xf32>
    %c0_36 = arith.constant 0 : index
    %c0_37 = arith.constant 0 : index
    %c0_38 = arith.constant 0 : index
    %92 = vector.load %arg7[%c0_36, %c0_37, %c0_38] : memref<1x8x32xf32, #tpu.memory_space<vmem>>, vector<1x8x32xf32>
    %93 = vector.shape_cast %92 : vector<1x8x32xf32> to vector<8x32xf32>
    %94 = vector.shape_cast %91 : vector<8x32xf32> to vector<1x8x32xf32>
    tpu.vector_store %arg7[%c0_36, %c0_37, %c0_38], %94 {strides = array<i32>} : memref<1x8x32xf32, #tpu.memory_space<vmem>>, vector<1x8x32xf32>,
    return
  }
  func.func @transform_0(%arg0: i32, %arg1: i32) -> (i32, i32, i32) {
    %c0_i32 = arith.constant 0 : i32
    %c0_i32_0 = arith.constant 0 : i32
    %c0_i32_1 = arith.constant 0 : i32
    return %arg0, %c0_i32, %c0_i32_0 : i32, i32, i32
  }
  func.func @transform_1(%arg0: i32, %arg1: i32) -> (i32, i32) {
    %c0_i32 = arith.constant 0 : i32
    %c0_i32_0 = arith.constant 0 : i32
    %c0_i32_1 = arith.constant 0 : i32
    return %c0_i32, %c0_i32_0 : i32, i32
  }
  func.func @transform_2(%arg0: i32, %arg1: i32) -> (i32, i32) {
    %c0_i32 = arith.constant 0 : i32
    %c0_i32_0 = arith.constant 0 : i32
    %c0_i32_1 = arith.constant 0 : i32
    return %c0_i32, %c0_i32_0 : i32, i32
  }
  func.func @transform_3(%arg0: i32, %arg1: i32) -> (i32, i32) {
    %c0_i32 = arith.constant 0 : i32
    %c0_i32_0 = arith.constant 0 : i32
    %c0_i32_1 = arith.constant 0 : i32
    return %c0_i32, %c0_i32_0 : i32, i32
  }
  func.func @transform_4(%arg0: i32, %arg1: i32) -> (i32, i32) {
    %c0_i32 = arith.constant 0 : i32
    %c0_i32_0 = arith.constant 0 : i32
    %c0_i32_1 = arith.constant 0 : i32
    return %c0_i32, %c0_i32_0 : i32, i32
  }
  func.func @transform_5(%arg0: i32, %arg1: i32) -> (i32, i32, i32) {
    %c0_i32 = arith.constant 0 : i32
    %c0_i32_0 = arith.constant 0 : i32
    return %arg0, %arg1, %c0_i32 : i32, i32, i32
  }
}

</mosaic_0001>

<llo_original>
// kernel: tpu_custom_call.1
$region0: #{tpu_custom_call.1}
  #allocation0 [shape = 'u32[]', space=smem, size = 0x4, offset = 0x4, fixed_abs, tag = 'smem constant byte address 0x4 - core index']
  #allocation1 [shape = 'u32[144,128]{1,0:T(1,128)}', space=vmem, size = 0x12000, scoped, tag = 'internal scratch']
  #allocation2 [shape = 'bf16[8,64]{1,0:T(8,128)(2,1)}', space=vmem, size = 0x800, scoped, tag = 'scratch operand']
  #allocation3 [shape = 'bf16[8,64]{1,0:T(8,128)(2,1)}', space=vmem, size = 0x800, scoped, tag = 'scratch operand']
  #allocation4 [shape = 'f32[8,64]{1,0:T(8,128)}', space=vmem, size = 0x1000, scoped, tag = 'scratch operand']
  %s0 = inlined_call_operand.vmem [shape: bf16[2,8,32], index: 0, kind: input, shape index: {}]
  %s1 = inlined_call_operand.vmem [shape: bf16[32,64], index: 1, kind: input, shape index: {}]
  %s2 = inlined_call_operand.vmem [shape: bf16[32,128], index: 2, kind: input, shape index: {}]
  %s3 = inlined_call_operand.vmem [shape: bf16[64,32], index: 3, kind: input, shape index: {}]
  %s4 = inlined_call_operand.vmem [shape: f32[1,32], index: 4, kind: input, shape index: {}]
  %s5 = inlined_call_operand.hbm [shape: f32[2,8,32], index: 5, kind: output, shape index: {}]
  %s6 = sld [smem:[#allocation0]]
  $region57: #{tpu_custom_call.1} parent=0
    _
  %s8 = ssub.s32 1, %s6
  %s9 = scalar_select 0, %s8, %s6
  $region1: #{tpu_custom_call.1} parent=0
    #allocation5 [shape = 'u8[8192]{0}', space=vmem, size = 0x2000, scoped, tag = 'output window, operand 0']
    #allocation6 [shape = 's32[2]{0}', space=sflag, size = 0x8, scoped, tag = 'scoped memory for tpu_custom_call.1']
    %10 = vsyncpa [#allocation6], 0
    %s11 = scalar_lea.sflag [#allocation6], 1
    %12 = vsyncpa %s11, 0
    loop: start=0, step=1, limit=4
    $region2: #{tpu_custom_call.1} parent=1 // loop_pre_header
      _
    $region3: #{tpu_custom_call.1} parent=1 // loop_header
      %s14 = sphi 0, %s18
      %p15 = scmp.ge.s32.totalorder %s14, 4
      %s21 = sphi 0, %s33
      %s22 = sphi 0, %s29
      %s23 = sphi 0, %s21
      %s24 = sphi 0, %s22
      %s25 = sphi 0, %s23
      %s26 = sphi 0, %s24
      %s36 = sphi 0, %s38
      %s39 = sphi 0, %s36
      %s40 = sphi 0, %s39
      %s56 = sphi 0, %s40
      %s60 = sphi 0, %s60
      %s62 = sphi 0, %s60
      %s63 = sphi 0, %s62
      %s77 = sphi 0, %s63
      %s81 = sphi 0, %s81
      %s83 = sphi 0, %s81
      %s84 = sphi 0, %s83
      %s98 = sphi 0, %s84
      %s102 = sphi 0, %s102
      %s104 = sphi 0, %s102
      %s105 = sphi 0, %s104
      %s119 = sphi 0, %s105
      %s123 = sphi 0, %s123
      %s125 = sphi 0, %s123
      %s126 = sphi 0, %s125
      %s140 = sphi 0, %s126
      %s148 = sphi 0, %s150
      %s151 = sphi 0, %s148
      %s152 = sphi 0, %s151
      %s168 = sphi 0, %s152
    $region4: #{tpu_custom_call.1} parent=1 // loop_header_branch
      %17 = sbr.rel (%p15) target = $region8
    $region5: #{tpu_custom_call.1} parent=1 // loop_body
      %s19 = ssub.s32 %s14, 1
      %s20 = ssub.s32 %s14, 2
      %s27 = sadd.s32 1, %s22
      %p28 = scmp.ge.s32.totalorder %s27, 1
      %s29 = scalar_select %p28, 0, %s27
      %s30 = sadd.s32 1, %s21
      %s31 = scalar_select %p28, %s30, %s21
      %p32 = scmp.ge.s32.totalorder %s31, 2
      %s33 = scalar_select %p32, 0, %s31
      %s34 = ssub.s32 %s21, %s33
      %p35 = scmp.eq.s32.totalorder %s34, 0
      %s37 = sadd.s32 %s36, 1
      %s38 = scalar_select %p35, %s36, %s37
      %p41 = pneg %p35
      %p42 = scmp.eq.s32.totalorder %s14, 1
      %p43 = por %p41, %p42
      %p44 = scmp.ne.s32.totalorder %s36, %s39
      %p45 = scmp.eq.s32.totalorder %s14, 0
      %p46 = por %p44, %p45
      %p47 = scmp.ne.s32.totalorder %s36, %s39
      %p48 = scmp.eq.s32.totalorder %s19, 1
      %p49 = por %p47, %p48
      %p50 = scmp.ne.s32.totalorder %s39, %s40
      %p51 = scmp.eq.s32.totalorder %s19, 0
      %p52 = por %p50, %p51
      %p53 = scmp.ne.s32.totalorder %s39, %s40
      %p54 = scmp.eq.s32.totalorder %s20, 1
      %p55 = por %p53, %p54
      %p57 = scmp.ne.s32.totalorder %s40, %s56
      %p58 = scmp.eq.s32.totalorder %s20, 0
      %p59 = por %p57, %p58
      %s61 = sadd.s32 %s60, 1
      %p64 = scmp.eq.s32.totalorder %s14, 1
      %p65 = scmp.ne.s32.totalorder %s60, %s62
      %p66 = scmp.eq.s32.totalorder %s14, 0
      %p67 = por %p65, %p66
      %p68 = scmp.ne.s32.totalorder %s60, %s62
      %p69 = scmp.eq.s32.totalorder %s19, 1
      %p70 = por %p68, %p69
      %p71 = scmp.ne.s32.totalorder %s62, %s63
      %p72 = scmp.eq.s32.totalorder %s19, 0
      %p73 = por %p71, %p72
      %p74 = scmp.ne.s32.totalorder %s62, %s63
      %p75 = scmp.eq.s32.totalorder %s20, 1
      %p76 = por %p74, %p75
      %p78 = scmp.ne.s32.totalorder %s63, %s77
      %p79 = scmp.eq.s32.totalorder %s20, 0
      %p80 = por %p78, %p79
      %s82 = sadd.s32 %s81, 1
      %p85 = scmp.eq.s32.totalorder %s14, 1
      %p86 = scmp.ne.s32.totalorder %s81, %s83
      %p87 = scmp.eq.s32.totalorder %s14, 0
      %p88 = por %p86, %p87
      %p89 = scmp.ne.s32.totalorder %s81, %s83
      %p90 = scmp.eq.s32.totalorder %s19, 1
      %p91 = por %p89, %p90
      %p92 = scmp.ne.s32.totalorder %s83, %s84
      %p93 = scmp.eq.s32.totalorder %s19, 0
      %p94 = por %p92, %p93
      %p95 = scmp.ne.s32.totalorder %s83, %s84
      %p96 = scmp.eq.s32.totalorder %s20, 1
      %p97 = por %p95, %p96
      %p99 = scmp.ne.s32.totalorder %s84, %s98
      %p100 = scmp.eq.s32.totalorder %s20, 0
      %p101 = por %p99, %p100
      %s103 = sadd.s32 %s102, 1
      %p106 = scmp.eq.s32.totalorder %s14, 1
      %p107 = scmp.ne.s32.totalorder %s102, %s104
      %p108 = scmp.eq.s32.totalorder %s14, 0
      %p109 = por %p107, %p108
      %p110 = scmp.ne.s32.totalorder %s102, %s104
      %p111 = scmp.eq.s32.totalorder %s19, 1
      %p112 = por %p110, %p111
      %p113 = scmp.ne.s32.totalorder %s104, %s105
      %p114 = scmp.eq.s32.totalorder %s19, 0
      %p115 = por %p113, %p114
      %p116 = scmp.ne.s32.totalorder %s104, %s105
      %p117 = scmp.eq.s32.totalorder %s20, 1
      %p118 = por %p116, %p117
      %p120 = scmp.ne.s32.totalorder %s105, %s119
      %p121 = scmp.eq.s32.totalorder %s20, 0
      %p122 = por %p120, %p121
      %s124 = sadd.s32 %s123, 1
      %p127 = scmp.eq.s32.totalorder %s14, 1
      %p128 = scmp.ne.s32.totalorder %s123, %s125
      %p129 = scmp.eq.s32.totalorder %s14, 0
      %p130 = por %p128, %p129
      %p131 = scmp.ne.s32.totalorder %s123, %s125
      %p132 = scmp.eq.s32.totalorder %s19, 1
      %p133 = por %p131, %p132
      %p134 = scmp.ne.s32.totalorder %s125, %s126
      %p135 = scmp.eq.s32.totalorder %s19, 0
      %p136 = por %p134, %p135
      %p137 = scmp.ne.s32.totalorder %s125, %s126
      %p138 = scmp.eq.s32.totalorder %s20, 1
      %p139 = por %p137, %p138
      %p141 = scmp.ne.s32.totalorder %s126, %s140
      %p142 = scmp.eq.s32.totalorder %s20, 0
      %p143 = por %p141, %p142
      %s144 = ssub.s32 %s21, %s33
      %s145 = ssub.s32 %s22, %s29
      %s146 = sor.u32 %s144, %s145
      %p147 = scmp.eq.s32.totalorder %s146, 0
      %s149 = sadd.s32 %s148, 1
      %s150 = scalar_select %p147, %s148, %s149
      %p153 = pneg %p147
      %p154 = scmp.eq.s32.totalorder %s14, 1
      %p155 = por %p153, %p154
      %p156 = scmp.ne.s32.totalorder %s148, %s151
      %p157 = scmp.eq.s32.totalorder %s14, 0
      %p158 = por %p156, %p157
      %p159 = scmp.ne.s32.totalorder %s148, %s151
      %p160 = scmp.eq.s32.totalorder %s19, 1
      %p161 = por %p159, %p160
      %p162 = scmp.ne.s32.totalorder %s151, %s152
      %p163 = scmp.eq.s32.totalorder %s19, 0
      %p164 = por %p162, %p163
      %p165 = scmp.ne.s32.totalorder %s151, %s152
      %p166 = scmp.eq.s32.totalorder %s20, 1
      %p167 = por %p165, %p166
      %p169 = scmp.ne.s32.totalorder %s152, %s168
      %p170 = scmp.eq.s32.totalorder %s20, 0
      %p171 = por %p169, %p170
      %p172 = scmp.le.s32.totalorder 1, %s14
      %p173 = scmp.lt.s32.totalorder %s14, 3
      %p174 = pnand %p172, %p173
      %p175 = pneg %p174
      // Predicated region
      $region9: #{tpu_custom_call.1} parent=5 // pred_check
        _
      $region10: #{tpu_custom_call.1} parent=5 // pred_check_branch
        %177 = sbr.rel (%p174) target = $region12
      $region11: #{tpu_custom_call.1} parent=5 // pred_region
        %s178 = ssub.s32 %s14, 1
        // Predicated region
        $region13: #{tpu_custom_call.1} parent=11 // pred_check
          %p179 = pneg %p73
        $region14: #{tpu_custom_call.1} parent=11 // pred_check_branch
          %181 = sbr.rel (%p179) target = $region16
        $region15: #{tpu_custom_call.1} parent=11 // pred_region
          _
        $region16: #{tpu_custom_call.1} parent=11 // pred_fallthru
          _
        // Predicated region
        $region17: #{tpu_custom_call.1} parent=11 // pred_check
          %p182 = pneg %p94
        $region18: #{tpu_custom_call.1} parent=11 // pred_check_branch
          %184 = sbr.rel (%p182) target = $region20
        $region19: #{tpu_custom_call.1} parent=11 // pred_region
          _
        $region20: #{tpu_custom_call.1} parent=11 // pred_fallthru
          _
        // Predicated region
        $region21: #{tpu_custom_call.1} parent=11 // pred_check
          %p185 = pneg %p115
        $region22: #{tpu_custom_call.1} parent=11 // pred_check_branch
          %187 = sbr.rel (%p185) target = $region24
        $region23: #{tpu_custom_call.1} parent=11 // pred_region
          _
        $region24: #{tpu_custom_call.1} parent=11 // pred_fallthru
          _
        // Predicated region
        $region25: #{tpu_custom_call.1} parent=11 // pred_check
          %p188 = pneg %p136
        $region26: #{tpu_custom_call.1} parent=11 // pred_check_branch
          %190 = sbr.rel (%p188) target = $region28
        $region27: #{tpu_custom_call.1} parent=11 // pred_region
          _
        $region28: #{tpu_custom_call.1} parent=11 // pred_fallthru
          _
      $region12: #{tpu_custom_call.1} parent=5 // pred_fallthru
        _
      %p191 = scmp.lt.s32.totalorder %s14, 2
      // Predicated region
      $region29: #{tpu_custom_call.1} parent=5 // pred_check
        %p192 = pneg %p191
      $region30: #{tpu_custom_call.1} parent=5 // pred_check_branch
        %194 = sbr.rel (%p192) target = $region32
      $region31: #{tpu_custom_call.1} parent=5 // pred_region
        // Predicated region
        $region33: #{tpu_custom_call.1} parent=31 // pred_check
          %p195 = pneg %p46
        $region34: #{tpu_custom_call.1} parent=31 // pred_check_branch
          %197 = sbr.rel (%p195) target = $region36
        $region35: #{tpu_custom_call.1} parent=31 // pred_region
          %p198 = scmp.lt.s32.totalorder %s21, 1
          %s199 = scalar_select %p198, %s21, 1
          %s200 = smul.addr %s199, 4
          %s201 = scalar_lea.vmem %s0, %s200
        $region36: #{tpu_custom_call.1} parent=31 // pred_fallthru
          _
      $region32: #{tpu_custom_call.1} parent=5 // pred_fallthru
        _
      %p202 = scmp.le.s32.totalorder 1, %s14
      %p203 = scmp.lt.s32.totalorder %s14, 3
      %p204 = pnand %p202, %p203
      %p205 = pneg %p204
      // Predicated region
      $region37: #{tpu_custom_call.1} parent=5 // pred_check
        _
      $region38: #{tpu_custom_call.1} parent=5 // pred_check_branch
        %207 = sbr.rel (%p204) target = $region40
      $region39: #{tpu_custom_call.1} parent=5 // pred_region
        %s208 = ssub.s32 %s14, 1
        %p209 = scmp.lt.s32.totalorder %s23, 1
        %s210 = scalar_select %p209, %s23, 1
        %s211 = smul.addr %s210, 4
        %s212 = scalar_lea.vmem %s0, %s211
        %p213 = pneg %p52
        %p214 = pneg %p49
        %p215 = pneg %p73
        %p216 = pneg %p70
        %p217 = pneg %p94
        %p218 = pneg %p91
        %p219 = pneg %p115
        %p220 = pneg %p112
        %p221 = pneg %p136
        %p222 = pneg %p133
        %p223 = pneg %p164
        %p224 = pneg %p161
        %s225 = sand.u32 %s151, 1
        %s226 = scalar_lea.sflag [#allocation6], %s225
        %s227 = sand.u32 %s151, 1
        %s228 = smul.addr %s227, 8
        %s229 = scalar_lea.vmem [#allocation5], %s228
        %p230 = scmp.lt.s32.totalorder %s23, 1
        %s231 = scalar_select %p230, %s23, 1
        %s232 = smul.addr %s231, 4
        %s233 = scalar_lea.vmem %s0, %s232
        %p235 = scmp.eq.s32.totalorder %s24, 0
        // Predicated region
        $region41: #{tpu_custom_call.1} parent=39 // pred_check
          %p236 = pneg %p235
        $region42: #{tpu_custom_call.1} parent=39 // pred_check_branch
          %238 = sbr.rel (%p236) target = $region44
        $region43: #{tpu_custom_call.1} parent=39 // pred_region
          %v239 = vld [vmem:[%s233] sm:$0xf]
          %v240 = vld [vmem:[%s2] sm:$0xf]
          %v241 = vld [vmem:[%s2 + $0x4] sm:$0xf]
          %v242 = vld [vmem:[%s2 + $0x8] sm:$0xf]
          %v243 = vld [vmem:[%s2 + $0xc] sm:$0xf]
          %v248 = vunpack.c.l.b16 %v240
          %v249 = vunpack.c.l.b16 %v241
          %v250 = vunpack.c.l.b16 %v242
          %v251 = vunpack.c.l.b16 %v243
          %v252 = vpack.c.b16 %v249, %v248
          %v253 = vpack.c.b16 %v251, %v250
          %vm256 = vcmask 261120
          %v258 = vsel %vm256, %v239, 0
          %260 = vmatprep.subr.bf16.mxu0 0
          %261 = vmatpush1.bf16.msra.mxu0 %v252
          %262 = vmatprep.subr.bf16.mxu0 0
          %263 = vmatpush1.bf16.msra.mxu0 %v253
          %264 = vmatprep.subr.bf16.mxu0 0
          %265 = vmatpush1.bf16.msra.mxu0 0
          %266 = vmatprep.subr.bf16.mxu0 0
          %267 = vmatpush1.bf16.msra.mxu0 0
          %268 = vmatprep.subr.bf16.mxu0 0
          %269 = vmatpush1.bf16.msra.mxu0 0
          %270 = vmatprep.subr.bf16.mxu0 0
          %271 = vmatpush1.bf16.msra.mxu0 0
          %272 = vmatprep.subr.bf16.mxu0 0
          %273 = vmatpush1.bf16.msra.mxu0 0
          %274 = vmatprep.subr.bf16.mxu0 0
          %275 = vmatpush1.bf16.msra.mxu0 0
          %276 = vmatprep.subr.bf16.mxu0 0
          %277 = vmatpush1.bf16.msra.mxu0 0
          %278 = vmatprep.subr.bf16.mxu0 0
          %279 = vmatpush1.bf16.msra.mxu0 0
          %280 = vmatprep.subr.bf16.mxu0 0
          %281 = vmatpush1.bf16.msra.mxu0 0
          %282 = vmatprep.subr.bf16.mxu0 0
          %283 = vmatpush1.bf16.msra.mxu0 0
          %284 = vmatprep.subr.bf16.mxu0 0
          %285 = vmatpush1.bf16.msra.mxu0 0
          %286 = vmatprep.subr.bf16.mxu0 0
          %287 = vmatpush1.bf16.msra.mxu0 0
          %288 = vmatprep.subr.bf16.mxu0 0
          %289 = vmatpush1.bf16.msra.mxu0 0
          %290 = vmatprep.subr.bf16.mxu0 0
          %291 = vmatpush1.bf16.msra.mxu0 0
          %292 = vmatprep.mubr.bf16.mxu0 0
          %293 = vmatmul.mubr.bf16.gmra.mrb[0].mxu0 %v258
          %v294 = vpop.f32.mrb[0].mxu0
          %v295 = vadd.f32 0.0, %v294
          %v296 = vpop.f32.mrb[0].mxu0
          %v297 = vpop.f32.mrb[0].mxu0
          %v298 = vpop.f32.mrb[0].mxu0
          %299 = vdwg.mxu0
          %v300 = vpack.c.bf16 %v295, %v295
          %vm301 = vcmask 519168
          %302 = vst.msk [vmem:[#allocation2] sm:$0xf] %vm301, %v300
          %v304 = vunpack.c.l.b16 %v300
          %v305 = vpack.c.b16 %v304, %v304
          %306 = vrot.lane.b32.xlu0 %v305, 64
          %v307 = vpop.permute.xlu0 %306
          %309 = vst.msk [vmem:[#allocation3] sm:$0xf] %vm301, %v307
        $region44: #{tpu_custom_call.1} parent=39 // pred_fallthru
          _
        %s310 = smul.u32 %s24, 8
        %s311 = sshra.s32 %s310, 3
        %s312 = sand.u32 %s310, 7
        %s313 = smul.addr %s311, 4
        %s314 = scalar_lea.vmem %s233, %s313
        %v315 = vld [vmem:[%s314] sm:$0xf]
        %v316 = vld [vmem:[%s1] sm:$0xf]
        %v317 = vld [vmem:[%s1 + $0x4] sm:$0xf]
        %v318 = vld [vmem:[%s1 + $0x8] sm:$0xf]
        %v319 = vld [vmem:[%s1 + $0xc] sm:$0xf]
        %v324 = vunpack.c.l.b16 %v316
        %v325 = vunpack.c.l.b16 %v317
        %v326 = vunpack.c.l.b16 %v318
        %v327 = vunpack.c.l.b16 %v319
        %v328 = vpack.c.b16 %v325, %v324
        %v329 = vpack.c.b16 %v327, %v326
        %vm332 = vcmask 261120
        %v334 = vsel %vm332, %v315, 0
        %336 = vmatprep.subr.bf16.mxu0 0
        %337 = vmatpush1.bf16.msra.mxu0 %v328
        %338 = vmatprep.subr.bf16.mxu0 0
        %339 = vmatpush1.bf16.msra.mxu0 %v329
        %340 = vmatprep.subr.bf16.mxu0 0
        %341 = vmatpush1.bf16.msra.mxu0 0
        %342 = vmatprep.subr.bf16.mxu0 0
        %343 = vmatpush1.bf16.msra.mxu0 0
        %344 = vmatprep.subr.bf16.mxu0 0
        %345 = vmatpush1.bf16.msra.mxu0 0
        %346 = vmatprep.subr.bf16.mxu0 0
        %347 = vmatpush1.bf16.msra.mxu0 0
        %348 = vmatprep.subr.bf16.mxu0 0
        %349 = vmatpush1.bf16.msra.mxu0 0
        %350 = vmatprep.subr.bf16.mxu0 0
        %351 = vmatpush1.bf16.msra.mxu0 0
        %352 = vmatprep.subr.bf16.mxu0 0
        %353 = vmatpush1.bf16.msra.mxu0 0
        %354 = vmatprep.subr.bf16.mxu0 0
        %355 = vmatpush1.bf16.msra.mxu0 0
        %356 = vmatprep.subr.bf16.mxu0 0
        %357 = vmatpush1.bf16.msra.mxu0 0
        %358 = vmatprep.subr.bf16.mxu0 0
        %359 = vmatpush1.bf16.msra.mxu0 0
        %360 = vmatprep.subr.bf16.mxu0 0
        %361 = vmatpush1.bf16.msra.mxu0 0
        %362 = vmatprep.subr.bf16.mxu0 0
        %363 = vmatpush1.bf16.msra.mxu0 0
        %364 = vmatprep.subr.bf16.mxu0 0
        %365 = vmatpush1.bf16.msra.mxu0 0
        %366 = vmatprep.subr.bf16.mxu0 0
        %367 = vmatpush1.bf16.msra.mxu0 0
        %368 = vmatprep.mubr.bf16.mxu0 0
        %369 = vmatmul.mubr.bf16.gmra.mrb[0].mxu0 %v334
        %v370 = vpop.f32.mrb[0].mxu0
        %v371 = vadd.f32 0.0, %v370
        %v372 = vpop.f32.mrb[0].mxu0
        %v373 = vpop.f32.mrb[0].mxu0
        %v374 = vpop.f32.mrb[0].mxu0
        %375 = vdwg.mxu0
        %v376 = vpack.c.bf16 %v371, %v371
        %v377 = vld [vmem:[#allocation2] sm:$0xf]
        %v378 = vld [vmem:[#allocation3] sm:$0xf]
        %vm379 = vcmask 130048
        %v381 = vsel %vm379, %v376, 0
        %v384 = vsel %vm379, %v377, 0
        %386 = vmatprep.subr.bf16.mxu0 0
        %387 = vmatpush1.bf16.xpose.msra.mxu0 %v384
        %388 = vmatprep.subr.bf16.mxu0 0
        %389 = vmatpush1.bf16.xpose.msra.mxu0 0
        %390 = vmatprep.subr.bf16.mxu0 0
        %391 = vmatpush1.bf16.xpose.msra.mxu0 0
        %392 = vmatprep.subr.bf16.mxu0 0
        %393 = vmatpush1.bf16.xpose.msra.mxu0 0
        %394 = vmatprep.subr.bf16.mxu0 0
        %395 = vmatpush1.bf16.xpose.msra.mxu0 0
        %396 = vmatprep.subr.bf16.mxu0 0
        %397 = vmatpush1.bf16.xpose.msra.mxu0 0
        %398 = vmatprep.subr.bf16.mxu0 0
        %399 = vmatpush1.bf16.xpose.msra.mxu0 0
        %400 = vmatprep.subr.bf16.mxu0 0
        %401 = vmatpush1.bf16.xpose.msra.mxu0 0
        %402 = vmatprep.subr.bf16.mxu0 0
        %403 = vmatpush1.bf16.xpose.msra.mxu0 0
        %404 = vmatprep.subr.bf16.mxu0 0
        %405 = vmatpush1.bf16.xpose.msra.mxu0 0
        %406 = vmatprep.subr.bf16.mxu0 0
        %407 = vmatpush1.bf16.xpose.msra.mxu0 0
        %408 = vmatprep.subr.bf16.mxu0 0
        %409 = vmatpush1.bf16.xpose.msra.mxu0 0
        %410 = vmatprep.subr.bf16.mxu0 0
        %411 = vmatpush1.bf16.xpose.msra.mxu0 0
        %412 = vmatprep.subr.bf16.mxu0 0
        %413 = vmatpush1.bf16.xpose.msra.mxu0 0
        %414 = vmatprep.subr.bf16.mxu0 0
        %415 = vmatpush1.bf16.xpose.msra.mxu0 0
        %416 = vmatprep.subr.bf16.mxu0 0
        %417 = vmatpush1.bf16.xpose.msra.mxu0 0
        %418 = vmatprep.mubr.bf16.mxu0 0
        %419 = vmatmul.mubr.bf16.gmra.mrb[0].mxu0 %v381
        %v420 = vpop.f32.mrb[0].mxu0
        %v421 = vadd.f32 0.0, %v420
        %v422 = vpop.f32.mrb[0].mxu0
        %v423 = vpop.f32.mrb[0].mxu0
        %v424 = vpop.f32.mrb[0].mxu0
        %425 = vdwg.mxu0
        %vm426 = vcmask 64512
        %v427 = vsel %vm426, %v421, -inf
        %428 = vmax.xlane.f32.xlu0 %v427
        %v429 = vpop.xlane.xlu0 %428
        %v430 = vsub.f32 %v421, %v429
        %v431 = vmul.f32 %v430, 1.442695
        %v432 = vpow.pop %v431
        %v433 = vsel %vm426, %v432, 0.0
        %434 = vadd.xlane.f32.xlu0 %v433
        %v435 = vpop.xlane.xlu0 %434
        %v436 = vrcp.pop %v435
        %v437 = vmul.f32 %v432, %v436
        %v438 = vpack.c.bf16 %v437, %v437
        %v440 = vsel %vm426, %v438, 0
        %vm442 = vcmask 1043456
        %v444 = vsel %vm442, %v378, 0
        %446 = vmatprep.subr.bf16.mxu0 0
        %447 = vmatpush1.bf16.msra.mxu0 %v444
        %448 = vmatprep.subr.bf16.mxu0 0
        %449 = vmatpush1.bf16.msra.mxu0 0
        %450 = vmatprep.subr.bf16.mxu0 0
        %451 = vmatpush1.bf16.msra.mxu0 0
        %452 = vmatprep.subr.bf16.mxu0 0
        %453 = vmatpush1.bf16.msra.mxu0 0
        %454 = vmatprep.subr.bf16.mxu0 0
        %455 = vmatpush1.bf16.msra.mxu0 0
        %456 = vmatprep.subr.bf16.mxu0 0
        %457 = vmatpush1.bf16.msra.mxu0 0
        %458 = vmatprep.subr.bf16.mxu0 0
        %459 = vmatpush1.bf16.msra.mxu0 0
        %460 = vmatprep.subr.bf16.mxu0 0
        %461 = vmatpush1.bf16.msra.mxu0 0
        %462 = vmatprep.subr.bf16.mxu0 0
        %463 = vmatpush1.bf16.msra.mxu0 0
        %464 = vmatprep.subr.bf16.mxu0 0
        %465 = vmatpush1.bf16.msra.mxu0 0
        %466 = vmatprep.subr.bf16.mxu0 0
        %467 = vmatpush1.bf16.msra.mxu0 0
        %468 = vmatprep.subr.bf16.mxu0 0
        %469 = vmatpush1.bf16.msra.mxu0 0
        %470 = vmatprep.subr.bf16.mxu0 0
        %471 = vmatpush1.bf16.msra.mxu0 0
        %472 = vmatprep.subr.bf16.mxu0 0
        %473 = vmatpush1.bf16.msra.mxu0 0
        %474 = vmatprep.subr.bf16.mxu0 0
        %475 = vmatpush1.bf16.msra.mxu0 0
        %476 = vmatprep.subr.bf16.mxu0 0
        %477 = vmatpush1.bf16.msra.mxu0 0
        %478 = vmatprep.mubr.bf16.mxu0 0
        %479 = vmatmul.mubr.bf16.gmra.mrb[0].mxu0 %v440
        %v480 = vpop.f32.mrb[0].mxu0
        %v481 = vadd.f32 0.0, %v480
        %v482 = vpop.f32.mrb[0].mxu0
        %v483 = vpop.f32.mrb[0].mxu0
        %v484 = vpop.f32.mrb[0].mxu0
        %485 = vdwg.mxu0
        %486 = vst.msk [vmem:[#allocation4] sm:$0xff] %vm379, %v481
        %488 = vrot.lane.b32.xlu0 %v376, 112
        %v489 = vpop.permute.xlu0 %488
        %v491 = vunpack.c.l.b16 %v377
        %v492 = vpack.c.b16 %v491, %v491
        %493 = vrot.lane.b32.xlu0 %v492, 112
        %v494 = vpop.permute.xlu0 %493
        %v496 = vsel %vm379, %v489, 0
        %v499 = vsel %vm379, %v494, 0
        %501 = vmatprep.subr.bf16.mxu0 0
        %502 = vmatpush1.bf16.xpose.msra.mxu0 %v499
        %503 = vmatprep.subr.bf16.mxu0 0
        %504 = vmatpush1.bf16.xpose.msra.mxu0 0
        %505 = vmatprep.subr.bf16.mxu0 0
        %506 = vmatpush1.bf16.xpose.msra.mxu0 0
        %507 = vmatprep.subr.bf16.mxu0 0
        %508 = vmatpush1.bf16.xpose.msra.mxu0 0
        %509 = vmatprep.subr.bf16.mxu0 0
        %510 = vmatpush1.bf16.xpose.msra.mxu0 0
        %511 = vmatprep.subr.bf16.mxu0 0
        %512 = vmatpush1.bf16.xpose.msra.mxu0 0
        %513 = vmatprep.subr.bf16.mxu0 0
        %514 = vmatpush1.bf16.xpose.msra.mxu0 0
        %515 = vmatprep.subr.bf16.mxu0 0
        %516 = vmatpush1.bf16.xpose.msra.mxu0 0
        %517 = vmatprep.subr.bf16.mxu0 0
        %518 = vmatpush1.bf16.xpose.msra.mxu0 0
        %519 = vmatprep.subr.bf16.mxu0 0
        %520 = vmatpush1.bf16.xpose.msra.mxu0 0
        %521 = vmatprep.subr.bf16.mxu0 0
        %522 = vmatpush1.bf16.xpose.msra.mxu0 0
        %523 = vmatprep.subr.bf16.mxu0 0
        %524 = vmatpush1.bf16.xpose.msra.mxu0 0
        %525 = vmatprep.subr.bf16.mxu0 0
        %526 = vmatpush1.bf16.xpose.msra.mxu0 0
        %527 = vmatprep.subr.bf16.mxu0 0
        %528 = vmatpush1.bf16.xpose.msra.mxu0 0
        %529 = vmatprep.subr.bf16.mxu0 0
        %530 = vmatpush1.bf16.xpose.msra.mxu0 0
        %531 = vmatprep.subr.bf16.mxu0 0
        %532 = vmatpush1.bf16.xpose.msra.mxu0 0
        %533 = vmatprep.mubr.bf16.mxu0 0
        %534 = vmatmul.mubr.bf16.gmra.mrb[0].mxu0 %v496
        %v535 = vpop.f32.mrb[0].mxu0
        %v536 = vadd.f32 0.0, %v535
        %v537 = vpop.f32.mrb[0].mxu0
        %v538 = vpop.f32.mrb[0].mxu0
        %v539 = vpop.f32.mrb[0].mxu0
        %540 = vdwg.mxu0
        %v541 = vsel %vm426, %v536, -inf
        %542 = vmax.xlane.f32.xlu0 %v541
        %v543 = vpop.xlane.xlu0 %542
        %v544 = vsub.f32 %v536, %v543
        %v545 = vmul.f32 %v544, 1.442695
        %v546 = vpow.pop %v545
        %v547 = vsel %vm426, %v546, 0.0
        %548 = vadd.xlane.f32.xlu0 %v547
        %v549 = vpop.xlane.xlu0 %548
        %v550 = vrcp.pop %v549
        %v551 = vmul.f32 %v546, %v550
        %v552 = vpack.c.bf16 %v551, %v551
        %v554 = vunpack.c.l.b16 %v378
        %v555 = vpack.c.b16 %v554, %v554
        %556 = vrot.lane.b32.xlu0 %v555, 112
        %v557 = vpop.permute.xlu0 %556
        %v559 = vsel %vm426, %v552, 0
        %v562 = vsel %vm442, %v557, 0
        %564 = vmatprep.subr.bf16.mxu0 0
        %565 = vmatpush1.bf16.msra.mxu0 %v562
        %566 = vmatprep.subr.bf16.mxu0 0
        %567 = vmatpush1.bf16.msra.mxu0 0
        %568 = vmatprep.subr.bf16.mxu0 0
        %569 = vmatpush1.bf16.msra.mxu0 0
        %570 = vmatprep.subr.bf16.mxu0 0
        %571 = vmatpush1.bf16.msra.mxu0 0
        %572 = vmatprep.subr.bf16.mxu0 0
        %573 = vmatpush1.bf16.msra.mxu0 0
        %574 = vmatprep.subr.bf16.mxu0 0
        %575 = vmatpush1.bf16.msra.mxu0 0
        %576 = vmatprep.subr.bf16.mxu0 0
        %577 = vmatpush1.bf16.msra.mxu0 0
        %578 = vmatprep.subr.bf16.mxu0 0
        %579 = vmatpush1.bf16.msra.mxu0 0
        %580 = vmatprep.subr.bf16.mxu0 0
        %581 = vmatpush1.bf16.msra.mxu0 0
        %582 = vmatprep.subr.bf16.mxu0 0
        %583 = vmatpush1.bf16.msra.mxu0 0
        %584 = vmatprep.subr.bf16.mxu0 0
        %585 = vmatpush1.bf16.msra.mxu0 0
        %586 = vmatprep.subr.bf16.mxu0 0
        %587 = vmatpush1.bf16.msra.mxu0 0
        %588 = vmatprep.subr.bf16.mxu0 0
        %589 = vmatpush1.bf16.msra.mxu0 0
        %590 = vmatprep.subr.bf16.mxu0 0
        %591 = vmatpush1.bf16.msra.mxu0 0
        %592 = vmatprep.subr.bf16.mxu0 0
        %593 = vmatpush1.bf16.msra.mxu0 0
        %594 = vmatprep.subr.bf16.mxu0 0
        %595 = vmatpush1.bf16.msra.mxu0 0
        %596 = vmatprep.mubr.bf16.mxu0 0
        %597 = vmatmul.mubr.bf16.gmra.mrb[0].mxu0 %v559
        %v598 = vpop.f32.mrb[0].mxu0
        %v599 = vadd.f32 0.0, %v598
        %v600 = vpop.f32.mrb[0].mxu0
        %v601 = vpop.f32.mrb[0].mxu0
        %v602 = vpop.f32.mrb[0].mxu0
        %603 = vdwg.mxu0
        %605 = vrot.lane.b32.xlu0 %v599, 16
        %v606 = vpop.permute.xlu0 %605
        %vm608 = vcmask 261248
        %609 = vst.msk [vmem:[#allocation4] sm:$0xff] %vm608, %v606
        %610 = vrot.lane.b32.xlu0 %v376, 96
        %v611 = vpop.permute.xlu0 %610
        %612 = vrot.lane.b32.xlu0 %v492, 96
        %v613 = vpop.permute.xlu0 %612
        %v615 = vsel %vm379, %v611, 0
        %v618 = vsel %vm379, %v613, 0
        %620 = vmatprep.subr.bf16.mxu0 0
        %621 = vmatpush1.bf16.xpose.msra.mxu0 %v618
        %622 = vmatprep.subr.bf16.mxu0 0
        %623 = vmatpush1.bf16.xpose.msra.mxu0 0
        %624 = vmatprep.subr.bf16.mxu0 0
        %625 = vmatpush1.bf16.xpose.msra.mxu0 0
        %626 = vmatprep.subr.bf16.mxu0 0
        %627 = vmatpush1.bf16.xpose.msra.mxu0 0
        %628 = vmatprep.subr.bf16.mxu0 0
        %629 = vmatpush1.bf16.xpose.msra.mxu0 0
        %630 = vmatprep.subr.bf16.mxu0 0
        %631 = vmatpush1.bf16.xpose.msra.mxu0 0
        %632 = vmatprep.subr.bf16.mxu0 0
        %633 = vmatpush1.bf16.xpose.msra.mxu0 0
        %634 = vmatprep.subr.bf16.mxu0 0
        %635 = vmatpush1.bf16.xpose.msra.mxu0 0
        %636 = vmatprep.subr.bf16.mxu0 0
        %637 = vmatpush1.bf16.xpose.msra.mxu0 0
        %638 = vmatprep.subr.bf16.mxu0 0
        %639 = vmatpush1.bf16.xpose.msra.mxu0 0
        %640 = vmatprep.subr.bf16.mxu0 0
        %641 = vmatpush1.bf16.xpose.msra.mxu0 0
        %642 = vmatprep.subr.bf16.mxu0 0
        %643 = vmatpush1.bf16.xpose.msra.mxu0 0
        %644 = vmatprep.subr.bf16.mxu0 0
        %645 = vmatpush1.bf16.xpose.msra.mxu0 0
        %646 = vmatprep.subr.bf16.mxu0 0
        %647 = vmatpush1.bf16.xpose.msra.mxu0 0
        %648 = vmatprep.subr.bf16.mxu0 0
        %649 = vmatpush1.bf16.xpose.msra.mxu0 0
        %650 = vmatprep.subr.bf16.mxu0 0
        %651 = vmatpush1.bf16.xpose.msra.mxu0 0
        %652 = vmatprep.mubr.bf16.mxu0 0
        %653 = vmatmul.mubr.bf16.gmra.mrb[0].mxu0 %v615
        %v654 = vpop.f32.mrb[0].mxu0
        %v655 = vadd.f32 0.0, %v654
        %v656 = vpop.f32.mrb[0].mxu0
        %v657 = vpop.f32.mrb[0].mxu0
        %v658 = vpop.f32.mrb[0].mxu0
        %659 = vdwg.mxu0
        %v660 = vsel %vm426, %v655, -inf
        %661 = vmax.xlane.f32.xlu0 %v660
        %v662 = vpop.xlane.xlu0 %661
        %v663 = vsub.f32 %v655, %v662
        %v664 = vmul.f32 %v663, 1.442695
        %v665 = vpow.pop %v664
        %v666 = vsel %vm426, %v665, 0.0
        %667 = vadd.xlane.f32.xlu0 %v666
        %v668 = vpop.xlane.xlu0 %667
        %v669 = vrcp.pop %v668
        %v670 = vmul.f32 %v665, %v669
        %v671 = vpack.c.bf16 %v670, %v670
        %672 = vrot.lane.b32.xlu0 %v555, 96
        %v673 = vpop.permute.xlu0 %672
        %v675 = vsel %vm426, %v671, 0
        %v678 = vsel %vm442, %v673, 0
        %680 = vmatprep.subr.bf16.mxu0 0
        %681 = vmatpush1.bf16.msra.mxu0 %v678
        %682 = vmatprep.subr.bf16.mxu0 0
        %683 = vmatpush1.bf16.msra.mxu0 0
        %684 = vmatprep.subr.bf16.mxu0 0
        %685 = vmatpush1.bf16.msra.mxu0 0
        %686 = vmatprep.subr.bf16.mxu0 0
        %687 = vmatpush1.bf16.msra.mxu0 0
        %688 = vmatprep.subr.bf16.mxu0 0
        %689 = vmatpush1.bf16.msra.mxu0 0
        %690 = vmatprep.subr.bf16.mxu0 0
        %691 = vmatpush1.bf16.msra.mxu0 0
        %692 = vmatprep.subr.bf16.mxu0 0
        %693 = vmatpush1.bf16.msra.mxu0 0
        %694 = vmatprep.subr.bf16.mxu0 0
        %695 = vmatpush1.bf16.msra.mxu0 0
        %696 = vmatprep.subr.bf16.mxu0 0
        %697 = vmatpush1.bf16.msra.mxu0 0
        %698 = vmatprep.subr.bf16.mxu0 0
        %699 = vmatpush1.bf16.msra.mxu0 0
        %700 = vmatprep.subr.bf16.mxu0 0
        %701 = vmatpush1.bf16.msra.mxu0 0
        %702 = vmatprep.subr.bf16.mxu0 0
        %703 = vmatpush1.bf16.msra.mxu0 0
        %704 = vmatprep.subr.bf16.mxu0 0
        %705 = vmatpush1.bf16.msra.mxu0 0
        %706 = vmatprep.subr.bf16.mxu0 0
        %707 = vmatpush1.bf16.msra.mxu0 0
        %708 = vmatprep.subr.bf16.mxu0 0
        %709 = vmatpush1.bf16.msra.mxu0 0
        %710 = vmatprep.subr.bf16.mxu0 0
        %711 = vmatpush1.bf16.msra.mxu0 0
        %712 = vmatprep.mubr.bf16.mxu0 0
        %713 = vmatmul.mubr.bf16.gmra.mrb[0].mxu0 %v675
        %v714 = vpop.f32.mrb[0].mxu0
        %v715 = vadd.f32 0.0, %v714
        %v716 = vpop.f32.mrb[0].mxu0
        %v717 = vpop.f32.mrb[0].mxu0
        %v718 = vpop.f32.mrb[0].mxu0
        %719 = vdwg.mxu0
        %721 = vrot.lane.b32.xlu0 %v715, 32
        %v722 = vpop.permute.xlu0 %721
        %vm724 = vcmask 392448
        %725 = vst.msk [vmem:[#allocation4] sm:$0xff] %vm724, %v722
        %726 = vrot.lane.b32.xlu0 %v376, 80
        %v727 = vpop.permute.xlu0 %726
        %728 = vrot.lane.b32.xlu0 %v492, 80
        %v729 = vpop.permute.xlu0 %728
        %v731 = vsel %vm379, %v727, 0
        %v734 = vsel %vm379, %v729, 0
        %736 = vmatprep.subr.bf16.mxu0 0
        %737 = vmatpush1.bf16.xpose.msra.mxu0 %v734
        %738 = vmatprep.subr.bf16.mxu0 0
        %739 = vmatpush1.bf16.xpose.msra.mxu0 0
        %740 = vmatprep.subr.bf16.mxu0 0
        %741 = vmatpush1.bf16.xpose.msra.mxu0 0
        %742 = vmatprep.subr.bf16.mxu0 0
        %743 = vmatpush1.bf16.xpose.msra.mxu0 0
        %744 = vmatprep.subr.bf16.mxu0 0
        %745 = vmatpush1.bf16.xpose.msra.mxu0 0
        %746 = vmatprep.subr.bf16.mxu0 0
        %747 = vmatpush1.bf16.xpose.msra.mxu0 0
        %748 = vmatprep.subr.bf16.mxu0 0
        %749 = vmatpush1.bf16.xpose.msra.mxu0 0
        %750 = vmatprep.subr.bf16.mxu0 0
        %751 = vmatpush1.bf16.xpose.msra.mxu0 0
        %752 = vmatprep.subr.bf16.mxu0 0
        %753 = vmatpush1.bf16.xpose.msra.mxu0 0
        %754 = vmatprep.subr.bf16.mxu0 0
        %755 = vmatpush1.bf16.xpose.msra.mxu0 0
        %756 = vmatprep.subr.bf16.mxu0 0
        %757 = vmatpush1.bf16.xpose.msra.mxu0 0
        %758 = vmatprep.subr.bf16.mxu0 0
        %759 = vmatpush1.bf16.xpose.msra.mxu0 0
        %760 = vmatprep.subr.bf16.mxu0 0
        %761 = vmatpush1.bf16.xpose.msra.mxu0 0
        %762 = vmatprep.subr.bf16.mxu0 0
        %763 = vmatpush1.bf16.xpose.msra.mxu0 0
        %764 = vmatprep.subr.bf16.mxu0 0
        %765 = vmatpush1.bf16.xpose.msra.mxu0 0
        %766 = vmatprep.subr.bf16.mxu0 0
        %767 = vmatpush1.bf16.xpose.msra.mxu0 0
        %768 = vmatprep.mubr.bf16.mxu0 0
        %769 = vmatmul.mubr.bf16.gmra.mrb[0].mxu0 %v731
        %v770 = vpop.f32.mrb[0].mxu0
        %v771 = vadd.f32 0.0, %v770
        %v772 = vpop.f32.mrb[0].mxu0
        %v773 = vpop.f32.mrb[0].mxu0
        %v774 = vpop.f32.mrb[0].mxu0
        %775 = vdwg.mxu0
        %v776 = vsel %vm426, %v771, -inf
        %777 = vmax.xlane.f32.xlu0 %v776
        %v778 = vpop.xlane.xlu0 %777
        %v779 = vsub.f32 %v771, %v778
        %v780 = vmul.f32 %v779, 1.442695
        %v781 = vpow.pop %v780
        %v782 = vsel %vm426, %v781, 0.0
        %783 = vadd.xlane.f32.xlu0 %v782
        %v784 = vpop.xlane.xlu0 %783
        %v785 = vrcp.pop %v784
        %v786 = vmul.f32 %v781, %v785
        %v787 = vpack.c.bf16 %v786, %v786
        %788 = vrot.lane.b32.xlu0 %v555, 80
        %v789 = vpop.permute.xlu0 %788
        %v791 = vsel %vm426, %v787, 0
        %v794 = vsel %vm442, %v789, 0
        %796 = vmatprep.subr.bf16.mxu0 0
        %797 = vmatpush1.bf16.msra.mxu0 %v794
        %798 = vmatprep.subr.bf16.mxu0 0
        %799 = vmatpush1.bf16.msra.mxu0 0
        %800 = vmatprep.subr.bf16.mxu0 0
        %801 = vmatpush1.bf16.msra.mxu0 0
        %802 = vmatprep.subr.bf16.mxu0 0
        %803 = vmatpush1.bf16.msra.mxu0 0
        %804 = vmatprep.subr.bf16.mxu0 0
        %805 = vmatpush1.bf16.msra.mxu0 0
        %806 = vmatprep.subr.bf16.mxu0 0
        %807 = vmatpush1.bf16.msra.mxu0 0
        %808 = vmatprep.subr.bf16.mxu0 0
        %809 = vmatpush1.bf16.msra.mxu0 0
        %810 = vmatprep.subr.bf16.mxu0 0
        %811 = vmatpush1.bf16.msra.mxu0 0
        %812 = vmatprep.subr.bf16.mxu0 0
        %813 = vmatpush1.bf16.msra.mxu0 0
        %814 = vmatprep.subr.bf16.mxu0 0
        %815 = vmatpush1.bf16.msra.mxu0 0
        %816 = vmatprep.subr.bf16.mxu0 0
        %817 = vmatpush1.bf16.msra.mxu0 0
        %818 = vmatprep.subr.bf16.mxu0 0
        %819 = vmatpush1.bf16.msra.mxu0 0
        %820 = vmatprep.subr.bf16.mxu0 0
        %821 = vmatpush1.bf16.msra.mxu0 0
        %822 = vmatprep.subr.bf16.mxu0 0
        %823 = vmatpush1.bf16.msra.mxu0 0
        %824 = vmatprep.subr.bf16.mxu0 0
        %825 = vmatpush1.bf16.msra.mxu0 0
        %826 = vmatprep.subr.bf16.mxu0 0
        %827 = vmatpush1.bf16.msra.mxu0 0
        %828 = vmatprep.mubr.bf16.mxu0 0
        %829 = vmatmul.mubr.bf16.gmra.mrb[0].mxu0 %v791
        %v830 = vpop.f32.mrb[0].mxu0
        %v831 = vadd.f32 0.0, %v830
        %v832 = vpop.f32.mrb[0].mxu0
        %v833 = vpop.f32.mrb[0].mxu0
        %v834 = vpop.f32.mrb[0].mxu0
        %835 = vdwg.mxu0
        %837 = vrot.lane.b32.xlu0 %v831, 48
        %v838 = vpop.permute.xlu0 %837
        %vm840 = vcmask 523648
        %841 = vst.msk [vmem:[#allocation4] sm:$0xff] %vm840, %v838
        %v842 = vld [vmem:[#allocation4] sm:$0xff]
        %v843 = vpack.c.bf16 %v842, %v842
        %v844 = vld [vmem:[%s3] sm:$0xf]
        %v845 = vld [vmem:[%s3 + $0x4] sm:$0xf]
        %v846 = vld [vmem:[%s3 + $0x8] sm:$0xf]
        %v847 = vld [vmem:[%s3 + $0xc] sm:$0xf]
        %v848 = vld [vmem:[%s3 + $0x10] sm:$0xf]
        %v849 = vld [vmem:[%s3 + $0x14] sm:$0xf]
        %v850 = vld [vmem:[%s3 + $0x18] sm:$0xf]
        %v851 = vld [vmem:[%s3 + $0x1c] sm:$0xf]
        %v852 = vld [vmem:[%s4] sm:$0x1]
        %v854 = vlaneseq
        %v855 = vshrl.u32 %v854, 7
        %v856 = vsub.s32 0, %v855
        %v857 = vrot.slane %v852, %v856
        %v867 = vunpack.c.l.b16 %v844
        %v868 = vunpack.c.l.b16 %v845
        %v869 = vunpack.c.l.b16 %v846
        %v870 = vunpack.c.l.b16 %v847
        %v871 = vunpack.c.l.b16 %v848
        %v872 = vunpack.c.l.b16 %v849
        %v873 = vunpack.c.l.b16 %v850
        %v874 = vunpack.c.l.b16 %v851
        %v875 = vpack.c.b16 %v868, %v867
        %v876 = vpack.c.b16 %v870, %v869
        %v877 = vpack.c.b16 %v872, %v871
        %v878 = vpack.c.b16 %v874, %v873
        %vm883 = vcmask 523264
        %v885 = vsel %vm883, %v843, 0
        %887 = vmatprep.subr.bf16.mxu0 0
        %888 = vmatpush1.bf16.msra.mxu0 %v875
        %889 = vmatprep.subr.bf16.mxu0 0
        %890 = vmatpush1.bf16.msra.mxu0 %v876
        %891 = vmatprep.subr.bf16.mxu0 0
        %892 = vmatpush1.bf16.msra.mxu0 %v877
        %893 = vmatprep.subr.bf16.mxu0 0
        %894 = vmatpush1.bf16.msra.mxu0 %v878
        %895 = vmatprep.subr.bf16.mxu0 0
        %896 = vmatpush1.bf16.msra.mxu0 0
        %897 = vmatprep.subr.bf16.mxu0 0
        %898 = vmatpush1.bf16.msra.mxu0 0
        %899 = vmatprep.subr.bf16.mxu0 0
        %900 = vmatpush1.bf16.msra.mxu0 0
        %901 = vmatprep.subr.bf16.mxu0 0
        %902 = vmatpush1.bf16.msra.mxu0 0
        %903 = vmatprep.subr.bf16.mxu0 0
        %904 = vmatpush1.bf16.msra.mxu0 0
        %905 = vmatprep.subr.bf16.mxu0 0
        %906 = vmatpush1.bf16.msra.mxu0 0
        %907 = vmatprep.subr.bf16.mxu0 0
        %908 = vmatpush1.bf16.msra.mxu0 0
        %909 = vmatprep.subr.bf16.mxu0 0
        %910 = vmatpush1.bf16.msra.mxu0 0
        %911 = vmatprep.subr.bf16.mxu0 0
        %912 = vmatpush1.bf16.msra.mxu0 0
        %913 = vmatprep.subr.bf16.mxu0 0
        %914 = vmatpush1.bf16.msra.mxu0 0
        %915 = vmatprep.subr.bf16.mxu0 0
        %916 = vmatpush1.bf16.msra.mxu0 0
        %917 = vmatprep.subr.bf16.mxu0 0
        %918 = vmatpush1.bf16.msra.mxu0 0
        %919 = vmatprep.mubr.bf16.mxu0 0
        %920 = vmatmul.mubr.bf16.gmra.mrb[0].mxu0 %v885
        %v921 = vpop.f32.mrb[0].mxu0
        %v922 = vadd.f32 %v857, %v921
        %v923 = vpop.f32.mrb[0].mxu0
        %v924 = vpop.f32.mrb[0].mxu0
        %v925 = vpop.f32.mrb[0].mxu0
        %926 = vdwg.mxu0
        %927 = vst.msk [vmem:[%s229] sm:$0xff] %vm332, %v922
        %s928 = sand.u32 %s151, 1
        %s929 = scalar_lea.sflag [#allocation6], %s928
        %s930 = sand.u32 %s151, 1
        %s931 = smul.addr %s930, 8
        %s932 = scalar_lea.vmem [#allocation5], %s931
        // Predicated region
        $region45: #{tpu_custom_call.1} parent=39 // pred_check
          %p933 = pneg %p161
        $region46: #{tpu_custom_call.1} parent=39 // pred_check_branch
          %935 = sbr.rel (%p933) target = $region48
        $region47: #{tpu_custom_call.1} parent=39 // pred_region
          %s937 = ssub.s32 128, 128
          %938 = vsyncadd %s929, %s937
          %s939 = sadd.s32 %s24, %s23
          %s940 = smul.addr %s939, 128
          %s941 = scalar_lea.hbm %s5, %s940
          %s943 = sshll.u32 %s932, 4
          %s944 = int_to_ptr.vmem [resolvable:$true] %s943
          %946 = dma.vmem_to_hbm [thread:$0]  %s944, 128, %s941, %s929
        $region48: #{tpu_custom_call.1} parent=39 // pred_fallthru
          _
      $region40: #{tpu_custom_call.1} parent=5 // pred_fallthru
        _
      %p947 = scmp.le.s32.totalorder 2, %s14
      // Predicated region
      $region49: #{tpu_custom_call.1} parent=5 // pred_check
        %p948 = pneg %p947
      $region50: #{tpu_custom_call.1} parent=5 // pred_check_branch
        %950 = sbr.rel (%p948) target = $region52
      $region51: #{tpu_custom_call.1} parent=5 // pred_region
        %s951 = ssub.s32 %s14, 2
        // Predicated region
        $region53: #{tpu_custom_call.1} parent=51 // pred_check
          %p952 = pneg %p167
        $region54: #{tpu_custom_call.1} parent=51 // pred_check_branch
          %954 = sbr.rel (%p952) target = $region56
        $region55: #{tpu_custom_call.1} parent=51 // pred_region
          %s955 = sand.u32 %s152, 1
          %s956 = scalar_lea.sflag [#allocation6], %s955
          %s957 = sand.u32 %s152, 1
          %s958 = smul.addr %s957, 8
          %s959 = scalar_lea.vmem [#allocation5], %s958
          %960 = dma.done %s956, 128
        $region56: #{tpu_custom_call.1} parent=51 // pred_fallthru
          _
      $region52: #{tpu_custom_call.1} parent=5 // pred_fallthru
        _
    $region6: #{tpu_custom_call.1} parent=1 // loop_footer
      %s18 = sadd.s32 1, %s14
    $region7: #{tpu_custom_call.1} parent=1 // loop_footer_branch
      %13 = sbr.rel target = $region3
    $region8: #{tpu_custom_call.1} parent=1 // loop_exit
      _
    %961 = vsyncpa [#allocation6], 1
    %s962 = scalar_lea.sflag [#allocation6], 1
    %963 = vsyncpa %s962, 1

</llo_original>
